<compile_context>
chip_gen: v6e
topology: v6e:2x2x1
jax: 0.10.0
libtpu: 0.0.40
codegen_flags: <defaults>
</compile_context>

<pallas_src>
import jax
import jax.numpy as jnp
from jax.experimental import pallas as pl
from jax.experimental.pallas import tpu as pltpu

_LANE = 128
_SMALL_BYTES = 2 * 1024 * 1024  # below this, one block has the least overhead


def _sublane_multiple(dtype) -> int:
    """Packed sublane multiple: 8 for 4-byte, 16 for 2-byte, 32 for 1-byte."""
    return max(8, 32 // jnp.dtype(dtype).itemsize)


# ---------------------------------------------------------------------------
# Path 1: zero-copy identity (no HBM traffic; output aliased onto the input).
# ---------------------------------------------------------------------------
def _passthrough_kernel(x_ref, o_ref):
    # The output buffer IS the input buffer (input_output_aliases={0: 0});
    # nothing has to move. touch() keeps the refs "used" so the empty kernel
    # and its alias survive lowering/DCE.
    pltpu.touch(x_ref)
    pltpu.touch(o_ref)


def _alias_identity(data: jax.Array) -> jax.Array:
    return pl.pallas_call(
        _passthrough_kernel,
        out_shape=jax.ShapeDtypeStruct(data.shape, data.dtype),
        in_specs=[pl.BlockSpec(memory_space=pl.ANY)],
        out_specs=pl.BlockSpec(memory_space=pl.ANY),
        input_output_aliases={0: 0},
        compiler_params=pltpu.CompilerParams(has_side_effects=True),
    )(data)


# ---------------------------------------------------------------------------
# Path 2: tiled, lane-dense memcpy (for callers that need a fresh buffer).
# ---------------------------------------------------------------------------
def _copy_kernel(x_ref, o_ref):
    o_ref[...] = x_ref[...]


def _tiled_copy_identity(data: jax.Array, *,
                         target_block_bytes: int = 8 * 1024 * 1024,
                         vmem_limit_bytes: int = 48 * 1024 * 1024) -> jax.Array:
    orig_shape = data.shape
    total = int(data.size)
    if total == 0:
        return data

    itemsize = jnp.dtype(data.dtype).itemsize
    sub = _sublane_multiple(data.dtype)
    # in + out, each double-buffered -> 4 blocks resident in VMEM at once.
    max_block_bytes = min(target_block_bytes, vmem_limit_bytes // 4)

    # Lane-dense re-blocking: a copy is layout-free, so view the data as
    # (rows, C) with C a multiple of 128; every block is then one contiguous
    # HBM slab and every store an unmasked full-lane vst.
    lane_c = next((c for c in (4096, 2048, 1024, 512, 256, _LANE)
                   if total % c == 0), 0)
    flat = data.reshape(-1)
    pad = 0
    if lane_c == 0:
        # TODO(synk): ragged element count (not a multiple of 128) — pad the
        # tail once so the kernel never sees a masked lane tail or an
        # un-capped block (one tiny extra pad/slice on a rare path).
        lane_c = _LANE
        pad = (-total) % _LANE
        flat = jnp.pad(flat, (0, pad))
    x = flat.reshape(-1, lane_c)

    n_rows = x.shape[0]
    row_bytes = lane_c * itemsize
    total_bytes = n_rows * row_bytes

    if total_bytes <= _SMALL_BYTES or n_rows < 2 * sub:
        tile_rows = n_rows  # small input: one full block, minimum overhead
    else:
        # ~8 MiB blocks, rounded to the packed sublane multiple, but never a
        # single block: >= 2 blocks lets v7x shard the copy over both cores.
        rows_per_block = max(sub, (max_block_bytes // row_bytes) // sub * sub)
        half_rows = -(-n_rows // 2)                 # ceil(N / 2)
        half_rows = -(-half_rows // sub) * sub      # round up to sublane mult
        tile_rows = min(rows_per_block, half_rows)

    grid = (pl.cdiv(n_rows, tile_rows),)
    spec = pl.BlockSpec((tile_rows, lane_c), lambda i: (i, 0))

    out = pl.pallas_call(
        _copy_kernel,
        out_shape=jax.ShapeDtypeStruct((n_rows, lane_c), x.dtype),
        grid=grid,
        in_specs=[spec],
        out_specs=spec,
        input_output_aliases={0: 0},
        compiler_params=pltpu.CompilerParams(
            dimension_semantics=("parallel",),
            vmem_limit_bytes=vmem_limit_bytes,
        ),
    )(x)

    out = out.reshape(-1)
    if pad:
        out = out[:total]
    return out.reshape(orig_shape)


_ZERO_COPY_SUPPORTED = True


def gcn_forward(data: jax.Array, *, materialize: bool = False,
                target_block_bytes: int = 8 * 1024 * 1024,
                vmem_limit_bytes: int = 48 * 1024 * 1024) -> jax.Array:
    """Pallas implementation of GCN.forward: the identity on `data`.

    materialize=False (default): zero-copy — the pallas output is aliased onto
    the input buffer and the kernel issues no HBM reads/writes.
    materialize=True: optimized tiled lane-dense copy into a fresh buffer.
    """
    global _ZERO_COPY_SUPPORTED
    if not materialize and _ZERO_COPY_SUPPORTED:
        try:
            return _alias_identity(data)
        except Exception:  # pragma: no cover
            # TODO(synk): pltpu.touch / ANY-space aliasing unavailable on this
            # jax build; fall back to the tiled copy so the forward still runs.
            _ZERO_COPY_SUPPORTED = False
    return _tiled_copy_identity(data,
                                target_block_bytes=target_block_bytes,
                                vmem_limit_bytes=vmem_limit_bytes)


if __name__ == "__main__":
    key = jax.random.PRNGKey(0)
    k1, k2, k3, k4 = jax.random.split(key, 4)

    # Typical small GCN node-feature slabs.
    x = jax.random.normal(k1, (64, 32), dtype=jnp.float32)     # F<128 -> lane-dense re-block
    y = jax.random.normal(k2, (128, 96), dtype=jnp.bfloat16)   # 2-byte dtype -> 16-row sublane mult
    z = jax.random.normal(k3, (7, 33), dtype=jnp.float32)      # ragged total -> padded path
    w = jax.random.normal(k4, (2560, 256), dtype=jnp.float32)  # 2.5 MiB -> >=2 parallel blocks

    for a in (x, y, z, w):
        out_alias = jax.block_until_ready(gcn_forward(a))
        out_copy = jax.block_until_ready(gcn_forward(a, materialize=True))
        assert out_alias.shape == a.shape and out_alias.dtype == a.dtype
        assert out_copy.shape == a.shape and out_copy.dtype == a.dtype
        assert bool(jnp.array_equal(out_alias, a))
        assert bool(jnp.array_equal(out_copy, a))

    # True zero-copy usage: donate the input so XLA can alias straight through.
    donating_fwd = jax.jit(gcn_forward, donate_argnums=0)
    v = jax.random.normal(key, (256, 64), dtype=jnp.float32)
    v_ref = jnp.array(v)                # keep a reference copy; v is donated
    out_donated = jax.block_until_ready(donating_fwd(v))
    assert out_donated.shape == v_ref.shape and out_donated.dtype == v_ref.dtype
    assert bool(jnp.array_equal(out_donated, v_ref))

    print("KERNEL_OK")
</pallas_src>

<mosaic_0001>
module attributes {stable_mosaic.version = 11 : i64} {
  func.func @_passthrough_kernel(%arg0: memref<64x32xf32, #tpu.memory_space<any>>, %arg1: memref<64x32xf32, #tpu.memory_space<any>>) attributes {dimension_semantics = [], scalar_prefetch = 0 : i64, scratch_operands = 0 : i64, tpu.core_type = #tpu.core_type<tc>} {
    return
  }
}

module attributes {stable_mosaic.version = 11 : i64} {
  func.func @_copy_kernel(%arg0: i32, %arg1: memref<1x2048xf32, #tpu.memory_space<vmem>>, %arg2: memref<1x2048xf32, #tpu.memory_space<vmem>>) attributes {dimension_semantics = [#tpu.dimension_semantics<parallel>], iteration_bounds = array<i64: 1>, scalar_prefetch = 0 : i64, scratch_operands = 0 : i64, tpu.core_type = #tpu.core_type<tc>, window_params = [{transform_indices = @transform_0, window_bounds = array<i64: 1, 2048>}, {transform_indices = @transform_1, window_bounds = array<i64: 1, 2048>}]} {
    %c0 = arith.constant 0 : index
    %c0_0 = arith.constant 0 : index
    %0 = vector.load %arg1[%c0, %c0_0] : memref<1x2048xf32, #tpu.memory_space<vmem>>, vector<1x2048xf32>
    %c0_1 = arith.constant 0 : index
    %c0_2 = arith.constant 0 : index
    %1 = vector.load %arg2[%c0_1, %c0_2] : memref<1x2048xf32, #tpu.memory_space<vmem>>, vector<1x2048xf32>
    tpu.vector_store %arg2[%c0_1, %c0_2], %0 {strides = array<i32>} : memref<1x2048xf32, #tpu.memory_space<vmem>>, vector<1x2048xf32>,
    return
  }
  func.func @transform_0(%arg0: i32) -> (i32, i32) {
    %c0_i32 = arith.constant 0 : i32
    %c0_i32_0 = arith.constant 0 : i32
    return %arg0, %c0_i32 : i32, i32
  }
  func.func @transform_1(%arg0: i32) -> (i32, i32) {
    %c0_i32 = arith.constant 0 : i32
    %c0_i32_0 = arith.constant 0 : i32
    return %arg0, %c0_i32 : i32, i32
  }
}

</mosaic_0001>

<llo_original>
// kernel: tpu_custom_call.1
$region0: #{tpu_custom_call.1}
  #allocation0 [shape = 'u32[]', space=smem, size = 0x4, offset = 0x4, fixed_abs, tag = 'smem constant byte address 0x4 - core index']
  #allocation1 [shape = 'u32[144,128]{1,0:T(1,128)}', space=vmem, size = 0x12000, scoped, tag = 'internal scratch']
  %s0 = inlined_call_operand.vmem [shape: f32[64,32], index: 0, kind: input, shape index: {}, may-alias: {0,1}]
  %s1 = inlined_call_operand.vmem [shape: f32[64,32], index: 1, kind: output, shape index: {}, may-alias: {0,1}]
  %s2 = sld [smem:[#allocation0]]
  $region2: #{tpu_custom_call.1} parent=0
    _
  %s4 = ssub.s32 1, %s2
  %s5 = scalar_select 0, %s4, %s2

// kernel: tpu_custom_call.1
$region0: #{tpu_custom_call.1}
  #allocation0 [shape = 'u32[]', space=smem, size = 0x4, offset = 0x4, fixed_abs, tag = 'smem constant byte address 0x4 - core index']
  #allocation1 [shape = 'u32[144,128]{1,0:T(1,128)}', space=vmem, size = 0x12000, scoped, tag = 'internal scratch']
  %s0 = inlined_call_operand.hbm [shape: f32[1,2048], index: 0, kind: input, shape index: {}, may-alias: {0,1}]
  %s1 = inlined_call_operand.hbm [shape: f32[1,2048], index: 1, kind: output, shape index: {}, may-alias: {0,1}]
  %s2 = sld [smem:[#allocation0]]
  $region18: #{tpu_custom_call.1} parent=0
    _
  %s4 = ssub.s32 1, %s2
  %s5 = scalar_select 0, %s4, %s2
  $region1: #{tpu_custom_call.1} parent=0
    #allocation2 [shape = 'u8[8192]{0}', space=vmem, size = 0x2000, scoped, tag = 'input window, operand 0, single buffered']
    #allocation3 [shape = 's32[1]{0}', space=sflag, size = 0x4, scoped, tag = 'scoped memory for tpu_custom_call.1']
    #allocation4 [shape = 's32[1]{0}', space=sflag, size = 0x4, scoped, tag = 'scoped memory for tpu_custom_call.1']
    #allocation5 [shape = 'u8[8192]{0}', space=vmem, size = 0x2000, scoped, tag = 'output window, operand 0, single buffered']
    %6 = vsyncpa [#allocation3], 0
    %7 = vsyncpa [#allocation4], 0
    // Predicated region
    $region2: #{tpu_custom_call.1} parent=1 // pred_check
      _
    $region3: #{tpu_custom_call.1} parent=1 // pred_check_branch
      %9 = sbr.rel (0) target = $region5
    $region4: #{tpu_custom_call.1} parent=1 // pred_region
      %s11 = ssub.s32 256, 256
      %12 = vsyncadd [#allocation3], %s11
      %s14 = sshll.u32 [#allocation2], 4
      %s15 = int_to_ptr.vmem [resolvable:$true] %s14
      %17 = dma.hbm_to_vmem [thread:$0]  %s0, 256, %s15, [#allocation3]
    $region5: #{tpu_custom_call.1} parent=1 // pred_fallthru
      _
    // Predicated region
    $region6: #{tpu_custom_call.1} parent=1 // pred_check
      _
    $region7: #{tpu_custom_call.1} parent=1 // pred_check_branch
      %19 = sbr.rel (0) target = $region9
    $region8: #{tpu_custom_call.1} parent=1 // pred_region
      %20 = dma.done [#allocation3], 256
    $region9: #{tpu_custom_call.1} parent=1 // pred_fallthru
      _
    %v21 = vld [vmem:[#allocation2] sm:$0xff]
    %v22 = vld [vmem:[#allocation2 + $0x8] sm:$0xff]
    %23 = vst [vmem:[#allocation5] sm:$0xff] %v21
    %24 = vst [vmem:[#allocation5 + $0x8] sm:$0xff] %v22
    // Predicated region
    $region10: #{tpu_custom_call.1} parent=1 // pred_check
      _
    $region11: #{tpu_custom_call.1} parent=1 // pred_check_branch
      %26 = sbr.rel (0) target = $region13
    $region12: #{tpu_custom_call.1} parent=1 // pred_region
      %s28 = ssub.s32 256, 256
      %29 = vsyncadd [#allocation4], %s28
      %s31 = sshll.u32 [#allocation5], 4
      %s32 = int_to_ptr.vmem [resolvable:$true] %s31
      %34 = dma.vmem_to_hbm [thread:$0]  %s32, 256, %s1, [#allocation4]
    $region13: #{tpu_custom_call.1} parent=1 // pred_fallthru
      _
    // Predicated region
    $region14: #{tpu_custom_call.1} parent=1 // pred_check
      _
    $region15: #{tpu_custom_call.1} parent=1 // pred_check_branch
      %36 = sbr.rel (0) target = $region17
    $region16: #{tpu_custom_call.1} parent=1 // pred_region
      %37 = dma.done [#allocation4], 256
    $region17: #{tpu_custom_call.1} parent=1 // pred_fallthru
      _
    %38 = vsyncpa [#allocation3], 1
    %39 = vsyncpa [#allocation4], 1

</llo_original>
